<compile_context>
chip_gen: v6e
topology: v6e:2x2x1
jax: 0.10.0
libtpu: 0.0.40
codegen_flags: <defaults>
</compile_context>

<pallas_src>
import functools

import jax
import jax.numpy as jnp
from jax.experimental import pallas as pl
from jax.experimental.pallas import tpu as pltpu


_NEG_FILL = -1e30  # bias fill for padded logit columns -> exp underflows to 0


def _round_up(x, m):
    return ((x + m - 1) // m) * m


def _num_tensorcores():
    """Best-effort TensorCore count per chip (v7x has 2; v5e/v6e have 1)."""
    try:
        kind = jax.devices()[0].device_kind.lower()
    except Exception:  # pragma: no cover - defensive
        return 1
    return 2 if "v7" in kind else 1


# --------------------------------------------------------------------------- #
# Kernel
# --------------------------------------------------------------------------- #
def _readout_kernel(x_ref, w0_ref, b0_ref, w1_ref, b1_ref, w2_ref, b2_ref, o_ref,
                    *, approx_recip):
    """Fused MLP hot path (3x matmul+bias, 2x ReLU, softmax) for one batch tile."""
    # In-kernel cast (f32 -> matmul dtype) rides the VPU; wrapper never rewrites x.
    x = x_ref[...].astype(w0_ref.dtype)

    # fc_0 + ReLU (MXU matmul with f32 accumulation; bias/ReLU in f32 on the VPU)
    h = jnp.dot(x, w0_ref[...], preferred_element_type=jnp.float32) + b0_ref[...]
    h = jnp.maximum(h, 0.0)

    # fc_1 + ReLU
    h = jnp.dot(h.astype(w1_ref.dtype), w1_ref[...],
                preferred_element_type=jnp.float32) + b1_ref[...]
    h = jnp.maximum(h, 0.0)

    # fc_output (padded logit columns carry bias=-1e30 -> vanish in the softmax)
    logits = jnp.dot(h.astype(w2_ref.dtype), w2_ref[...],
                     preferred_element_type=jnp.float32) + b2_ref[...]

    # Softmax(dim=-1), numerically stable; only the final store is downcast.
    m = jnp.max(logits, axis=-1, keepdims=True)
    e = jnp.exp(logits - m)
    denom = jnp.sum(e, axis=-1, keepdims=True)
    o_ref[...] = (e * pl.reciprocal(denom, approx=approx_recip)).astype(o_ref.dtype)


# --------------------------------------------------------------------------- #
# One-time parameter preparation (hoisted out of the per-call path)
# --------------------------------------------------------------------------- #
def prepare_readout_params(params, *, matmul_dtype=jnp.bfloat16):
    """Transpose / 128-lane pad / cast the weights once.

    params = (w0, b0, w1, b1, w2, b2) in PyTorch nn.Linear layout (out, in).
    Returns (prepared_arrays, meta) where prepared_arrays feed the kernel.
    """
    w0, b0, w1, b1, w2, b2 = params
    D_in, H0, H1, D_out = w0.shape[1], w0.shape[0], w1.shape[0], w2.shape[0]

    H0_p, H1_p, D_out_p = _round_up(H0, 128), _round_up(H1, 128), _round_up(D_out, 128)

    def pad2d(a, rows, cols, fill=0.0):
        r, c = a.shape
        if (r, c) == (rows, cols):
            return a
        return jnp.pad(a, ((0, rows - r), (0, cols - c)), constant_values=fill)

    mm_dtype = jnp.float32 if matmul_dtype is None else matmul_dtype

    # Pre-transpose PyTorch (out, in) -> (in, out) so the kernel does x @ W + b.
    # D_in is NOT lane-padded: the weight block is full-extent on both dims.
    w0t = pad2d(w0.T, D_in, H0_p).astype(mm_dtype)
    w1t = pad2d(w1.T, H0_p, H1_p).astype(mm_dtype)
    w2t = pad2d(w2.T, H1_p, D_out_p).astype(mm_dtype)
    b0r = pad2d(b0[None, :].astype(jnp.float32), 1, H0_p)
    b1r = pad2d(b1[None, :].astype(jnp.float32), 1, H1_p)
    # Padded output columns must not pollute the softmax denominator; b2 stays f32.
    b2r = pad2d(b2[None, :].astype(jnp.float32), 1, D_out_p, fill=_NEG_FILL)

    prepared = (w0t, b0r, w1t, b1r, w2t, b2r)
    meta = dict(D_in=D_in, H0_p=H0_p, H1_p=H1_p, D_out=D_out, D_out_p=D_out_p,
                mm_dtype=mm_dtype)
    return prepared, meta


# --------------------------------------------------------------------------- #
# Forward
# --------------------------------------------------------------------------- #
def readout_network_apply(x, prepared, meta, *, tile_b=512, out_dtype=None,
                          approx_recip=True, num_cores=None):
    """Apply the readout MLP with already-prepared (padded/cast) parameters."""
    w0t, b0r, w1t, b1r, w2t, b2r = prepared
    B, D_in = x.shape
    assert D_in == meta["D_in"], "input feature dim mismatch"
    H0_p, H1_p, D_out, D_out_p = (meta["H0_p"], meta["H1_p"],
                                  meta["D_out"], meta["D_out_p"])
    mm_dtype = meta["mm_dtype"]

    if out_dtype is None:
        out_dtype = jnp.float32 if mm_dtype == jnp.float32 else jnp.bfloat16

    # ---- batch tiling: rebalanced cdiv grid so B_pad tracks B ----
    num_cores = _num_tensorcores() if num_cores is None else num_cores
    tile_cap = max(16, min(int(tile_b), _round_up(B, 16)))  # tiny batch -> one tile
    num_tiles = pl.cdiv(B, tile_cap)
    # v7x: make sure both TensorCores get work when the batch is big enough.
    if num_cores > 1 and num_tiles < num_cores and B >= 32 * num_cores:
        num_tiles = num_cores
    tile_b_eff = _round_up(pl.cdiv(B, num_tiles), 16)       # 16 = bf16 sublane pack
    num_tiles = pl.cdiv(B, tile_b_eff)
    B_pad = num_tiles * tile_b_eff

    # Only row-pad x when needed (<16 rows per tile); never lane-pad or cast it.
    x_p = x if B_pad == B else jnp.pad(x, ((0, B_pad - B), (0, 0)))

    # ---- VMEM guard (matters on v7x: 64 MiB physical / 32 MiB default scoped) ----
    mm_bytes = jnp.dtype(mm_dtype).itemsize
    footprint = ((D_in * H0_p + H0_p * H1_p + H1_p * D_out_p) * mm_bytes      # weights
                 + (H0_p + H1_p + D_out_p) * 4                                # biases
                 + 2 * tile_b_eff * D_in * x.dtype.itemsize                   # x dbl-buf
                 + 2 * tile_b_eff * D_out_p * jnp.dtype(out_dtype).itemsize)  # out dbl-buf
    vmem_limit = None
    if footprint > (24 << 20):
        vmem_limit = min(int(footprint * 3 // 2) + (4 << 20), 120 << 20)
    # TODO(synk): for reservoirs where the resident w0 alone approaches the VMEM
    # ceiling (D_in*H0 bf16 >> 32 MiB), switch to a K-tiled grid (reduction axis
    # over D_in, f32 accumulator, axis marked "arbitrary") instead of resident
    # weights. Not wired up here.

    # Weights/biases are grid-invariant (index_map always (0,0)) -> single-buffer.
    resident = lambda shape: pl.BlockSpec(shape, lambda i: (0, 0),
                                          pipeline_mode=pl.Buffered(1))

    out = pl.pallas_call(
        functools.partial(_readout_kernel, approx_recip=approx_recip),
        out_shape=jax.ShapeDtypeStruct((B_pad, D_out_p), out_dtype),
        grid_spec=pltpu.PrefetchScalarGridSpec(
            num_scalar_prefetch=0,
            grid=(num_tiles,),
            in_specs=[
                pl.BlockSpec((tile_b_eff, D_in), lambda i: (i, 0)),  # x tile (true D_in)
                resident((D_in, H0_p)),                              # w0^T
                resident((1, H0_p)),                                 # b0
                resident((H0_p, H1_p)),                              # w1^T
                resident((1, H1_p)),                                 # b1
                resident((H1_p, D_out_p)),                           # w2^T
                resident((1, D_out_p)),                              # b2 (f32, -1e30 pad)
            ],
            out_specs=pl.BlockSpec((tile_b_eff, D_out_p), lambda i: (i, 0)),
        ),
        compiler_params=pltpu.CompilerParams(
            dimension_semantics=("parallel",),
            vmem_limit_bytes=vmem_limit,
        ),
    )(x_p, w0t, b0r, w1t, b1r, w2t, b2r)

    return out[:B, :D_out]


def readout_network_forward(x, params, *, tile_b=512, matmul_dtype=jnp.bfloat16,
                            out_dtype=None, approx_recip=True, num_cores=None):
    """Convenience path: prepares params per call.  For static inference weights
    prefer prepare_readout_params() once + readout_network_apply()."""
    # TODO(synk): only the hidden_layers=[H0, H1] + softmax configuration is wired
    # up; sigmoid/relu output activations and the hidden_layers=None single-Linear
    # case would reuse the same kernel skeleton with a different epilogue.
    prepared, meta = prepare_readout_params(params, matmul_dtype=matmul_dtype)
    return readout_network_apply(x, prepared, meta, tile_b=tile_b,
                                 out_dtype=out_dtype, approx_recip=approx_recip,
                                 num_cores=num_cores)


# --------------------------------------------------------------------------- #
# Reference + self-test
# --------------------------------------------------------------------------- #
def _init_linear(key, out_features, in_features):
    """Deterministic PyTorch-style init: U(-1/sqrt(fan_in), 1/sqrt(fan_in))."""
    kw, kb = jax.random.split(key)
    bound = 1.0 / jnp.sqrt(jnp.asarray(in_features, jnp.float32))
    w = jax.random.uniform(kw, (out_features, in_features), jnp.float32,
                           minval=-bound, maxval=bound)
    b = jax.random.uniform(kb, (out_features,), jnp.float32,
                           minval=-bound, maxval=bound)
    return w, b


def _reference_forward(x, params):
    """Pure-JAX reference matching the PyTorch forward."""
    w0, b0, w1, b1, w2, b2 = params
    h = jnp.maximum(x @ w0.T + b0, 0.0)
    h = jnp.maximum(h @ w1.T + b1, 0.0)
    logits = h @ w2.T + b2
    return jax.nn.softmax(logits, axis=-1)


if __name__ == "__main__":
    # Small shapes consistent with the module:
    #   input_size=32, hidden_layers=[64, 48], output_size=16,
    #   output_activation='softmax', batch=16.
    B, D_in, H0, H1, D_out = 16, 32, 64, 48, 16

    key = jax.random.PRNGKey(0)
    kx, kx2, k0, k1, k2 = jax.random.split(key, 5)

    x = jax.random.normal(kx, (B, D_in), jnp.float32)
    w0, b0 = _init_linear(k0, H0, D_in)
    w1, b1 = _init_linear(k1, H1, H0)
    w2, b2 = _init_linear(k2, D_out, H1)
    params = (w0, b0, w1, b1, w2, b2)

    ref = _reference_forward(x, params)

    # Exactness path: f32 matmuls + exact reciprocal + f32 output, tight tolerance.
    out_f32 = readout_network_forward(x, params, matmul_dtype=None,
                                      out_dtype=jnp.float32, approx_recip=False)
    out_f32 = jax.block_until_ready(out_f32)
    assert out_f32.shape == (B, D_out)
    assert jnp.allclose(out_f32, ref, atol=1e-5, rtol=1e-5), "f32 path mismatch"

    # Fast path (defaults): bf16 MXU matmuls, bf16 writeback, approx reciprocal,
    # params prepared once (hoisted prep).
    prepared, meta = prepare_readout_params(params)
    out_fast = readout_network_apply(x, prepared, meta)
    out_fast = jax.block_until_ready(out_fast)
    assert out_fast.shape == (B, D_out)
    assert jnp.allclose(out_fast.astype(jnp.float32), ref, atol=2e-2, rtol=2e-2), \
        "bf16 path mismatch"

    # Ragged batch: exercises the rebalanced cdiv grid + row-only padding path.
    B2 = 300
    x2 = jax.random.normal(kx2, (B2, D_in), jnp.float32)
    ref2 = _reference_forward(x2, params)
    out2 = readout_network_apply(x2, prepared, meta, tile_b=128)
    out2 = jax.block_until_ready(out2)
    assert out2.shape == (B2, D_out)
    assert jnp.allclose(out2.astype(jnp.float32), ref2, atol=2e-2, rtol=2e-2), \
        "ragged-batch path mismatch"

    print("KERNEL_OK")
</pallas_src>

<mosaic_0001>
module attributes {stable_mosaic.version = 11 : i64} {
  func.func @_readout_kernel(%arg0: i32, %arg1: memref<16x32xf32, #tpu.memory_space<vmem>>, %arg2: memref<32x128xf32, #tpu.memory_space<vmem>>, %arg3: memref<1x128xf32, #tpu.memory_space<vmem>>, %arg4: memref<128x128xf32, #tpu.memory_space<vmem>>, %arg5: memref<1x128xf32, #tpu.memory_space<vmem>>, %arg6: memref<128x128xf32, #tpu.memory_space<vmem>>, %arg7: memref<1x128xf32, #tpu.memory_space<vmem>>, %arg8: memref<16x128xf32, #tpu.memory_space<vmem>>) attributes {dimension_semantics = [#tpu.dimension_semantics<parallel>], iteration_bounds = array<i64: 1>, scalar_prefetch = 0 : i64, scratch_operands = 0 : i64, tpu.core_type = #tpu.core_type<tc>, window_params = [{transform_indices = @transform_0, window_bounds = array<i64: 16, 32>}, {pipeline_mode = #tpu.pipeline_mode<synchronous>, transform_indices = @transform_1, window_bounds = array<i64: 32, 128>}, {pipeline_mode = #tpu.pipeline_mode<synchronous>, transform_indices = @transform_2, window_bounds = array<i64: 1, 128>}, {pipeline_mode = #tpu.pipeline_mode<synchronous>, transform_indices = @transform_3, window_bounds = array<i64: 128, 128>}, {pipeline_mode = #tpu.pipeline_mode<synchronous>, transform_indices = @transform_4, window_bounds = array<i64: 1, 128>}, {pipeline_mode = #tpu.pipeline_mode<synchronous>, transform_indices = @transform_5, window_bounds = array<i64: 128, 128>}, {pipeline_mode = #tpu.pipeline_mode<synchronous>, transform_indices = @transform_6, window_bounds = array<i64: 1, 128>}, {transform_indices = @transform_7, window_bounds = array<i64: 16, 128>}]} {
    %c0 = arith.constant 0 : index
    %c0_0 = arith.constant 0 : index
    %0 = vector.load %arg1[%c0, %c0_0] : memref<16x32xf32, #tpu.memory_space<vmem>>, vector<16x32xf32>
    %c0_1 = arith.constant 0 : index
    %c0_2 = arith.constant 0 : index
    %1 = vector.load %arg2[%c0_1, %c0_2] : memref<32x128xf32, #tpu.memory_space<vmem>>, vector<32x128xf32>
    %cst = arith.constant dense<0.000000e+00> : vector<16x128xf32>
    %2 = tpu.matmul %0, %1, %cst {dimension_numbers = #tpu.dot_dimension_numbers<[1], [0], [0], [1], [0, 0, 1, 1], [], []>} : vector<16x32xf32>, vector<32x128xf32>, vector<16x128xf32> -> vector<16x128xf32>
    %c0_3 = arith.constant 0 : index
    %c0_4 = arith.constant 0 : index
    %3 = vector.load %arg3[%c0_3, %c0_4] : memref<1x128xf32, #tpu.memory_space<vmem>>, vector<1x128xf32>
    %4 = vector.broadcast %3 : vector<1x128xf32> to vector<16x128xf32>
    %5 = arith.addf %2, %4 : vector<16x128xf32>
    %cst_5 = arith.constant 0.000000e+00 : f32
    %6 = vector.broadcast %cst_5 : f32 to vector<16x128xf32>
    %7 = arith.maximumf %5, %6 : vector<16x128xf32>
    %c0_6 = arith.constant 0 : index
    %c0_7 = arith.constant 0 : index
    %8 = vector.load %arg4[%c0_6, %c0_7] : memref<128x128xf32, #tpu.memory_space<vmem>>, vector<128x128xf32>
    %cst_8 = arith.constant dense<0.000000e+00> : vector<16x128xf32>
    %9 = tpu.matmul %7, %8, %cst_8 {dimension_numbers = #tpu.dot_dimension_numbers<[1], [0], [0], [1], [0, 0, 1, 1], [], []>} : vector<16x128xf32>, vector<128x128xf32>, vector<16x128xf32> -> vector<16x128xf32>
    %c0_9 = arith.constant 0 : index
    %c0_10 = arith.constant 0 : index
    %10 = vector.load %arg5[%c0_9, %c0_10] : memref<1x128xf32, #tpu.memory_space<vmem>>, vector<1x128xf32>
    %11 = vector.broadcast %10 : vector<1x128xf32> to vector<16x128xf32>
    %12 = arith.addf %9, %11 : vector<16x128xf32>
    %cst_11 = arith.constant 0.000000e+00 : f32
    %13 = vector.broadcast %cst_11 : f32 to vector<16x128xf32>
    %14 = arith.maximumf %12, %13 : vector<16x128xf32>
    %c0_12 = arith.constant 0 : index
    %c0_13 = arith.constant 0 : index
    %15 = vector.load %arg6[%c0_12, %c0_13] : memref<128x128xf32, #tpu.memory_space<vmem>>, vector<128x128xf32>
    %cst_14 = arith.constant dense<0.000000e+00> : vector<16x128xf32>
    %16 = tpu.matmul %14, %15, %cst_14 {dimension_numbers = #tpu.dot_dimension_numbers<[1], [0], [0], [1], [0, 0, 1, 1], [], []>} : vector<16x128xf32>, vector<128x128xf32>, vector<16x128xf32> -> vector<16x128xf32>
    %c0_15 = arith.constant 0 : index
    %c0_16 = arith.constant 0 : index
    %17 = vector.load %arg7[%c0_15, %c0_16] : memref<1x128xf32, #tpu.memory_space<vmem>>, vector<1x128xf32>
    %18 = vector.broadcast %17 : vector<1x128xf32> to vector<16x128xf32>
    %19 = arith.addf %16, %18 : vector<16x128xf32>
    %cst_17 = arith.constant dense<0xFF800000> : vector<16xf32>
    %20 = vector.multi_reduction <maximumf>, %19, %cst_17 [1] : vector<16x128xf32> to vector<16xf32>
    %21 = vector.shape_cast %20 : vector<16xf32> to vector<16x1xf32>
    %22 = vector.broadcast %21 : vector<16x1xf32> to vector<16x128xf32>
    %23 = arith.subf %19, %22 : vector<16x128xf32>
    %24 = math.exp %23 : vector<16x128xf32>
    %cst_18 = arith.constant dense<0.000000e+00> : vector<16xf32>
    %25 = vector.multi_reduction <add>, %24, %cst_18 [1] : vector<16x128xf32> to vector<16xf32>
    %26 = vector.shape_cast %25 : vector<16xf32> to vector<16x1xf32>
    %27 = tpu.reciprocal %26 : vector<16x1xf32> -> vector<16x1xf32>
    %28 = vector.broadcast %27 : vector<16x1xf32> to vector<16x128xf32>
    %29 = arith.mulf %24, %28 : vector<16x128xf32>
    %c0_19 = arith.constant 0 : index
    %c0_20 = arith.constant 0 : index
    %30 = vector.load %arg8[%c0_19, %c0_20] : memref<16x128xf32, #tpu.memory_space<vmem>>, vector<16x128xf32>
    tpu.vector_store %arg8[%c0_19, %c0_20], %29 {strides = array<i32>} : memref<16x128xf32, #tpu.memory_space<vmem>>, vector<16x128xf32>,
    return
  }
  func.func @transform_0(%arg0: i32) -> (i32, i32) {
    %c0_i32 = arith.constant 0 : i32
    %c0_i32_0 = arith.constant 0 : i32
    return %arg0, %c0_i32 : i32, i32
  }
  func.func @transform_1(%arg0: i32) -> (i32, i32) {
    %c0_i32 = arith.constant 0 : i32
    %c0_i32_0 = arith.constant 0 : i32
    %c0_i32_1 = arith.constant 0 : i32
    return %c0_i32, %c0_i32_0 : i32, i32
  }
  func.func @transform_2(%arg0: i32) -> (i32, i32) {
    %c0_i32 = arith.constant 0 : i32
    %c0_i32_0 = arith.constant 0 : i32
    %c0_i32_1 = arith.constant 0 : i32
    return %c0_i32, %c0_i32_0 : i32, i32
  }
  func.func @transform_3(%arg0: i32) -> (i32, i32) {
    %c0_i32 = arith.constant 0 : i32
    %c0_i32_0 = arith.constant 0 : i32
    %c0_i32_1 = arith.constant 0 : i32
    return %c0_i32, %c0_i32_0 : i32, i32
  }
  func.func @transform_4(%arg0: i32) -> (i32, i32) {
    %c0_i32 = arith.constant 0 : i32
    %c0_i32_0 = arith.constant 0 : i32
    %c0_i32_1 = arith.constant 0 : i32
    return %c0_i32, %c0_i32_0 : i32, i32
  }
  func.func @transform_5(%arg0: i32) -> (i32, i32) {
    %c0_i32 = arith.constant 0 : i32
    %c0_i32_0 = arith.constant 0 : i32
    %c0_i32_1 = arith.constant 0 : i32
    return %c0_i32, %c0_i32_0 : i32, i32
  }
  func.func @transform_6(%arg0: i32) -> (i32, i32) {
    %c0_i32 = arith.constant 0 : i32
    %c0_i32_0 = arith.constant 0 : i32
    %c0_i32_1 = arith.constant 0 : i32
    return %c0_i32, %c0_i32_0 : i32, i32
  }
  func.func @transform_7(%arg0: i32) -> (i32, i32) {
    %c0_i32 = arith.constant 0 : i32
    %c0_i32_0 = arith.constant 0 : i32
    return %arg0, %c0_i32 : i32, i32
  }
}

</mosaic_0001>

<llo_original>
// kernel: tpu_custom_call.1
$region0: #{tpu_custom_call.1}
  #allocation0 [shape = 'u32[]', space=smem, size = 0x4, offset = 0x4, fixed_abs, tag = 'smem constant byte address 0x4 - core index']
  #allocation1 [shape = 'u32[144,128]{1,0:T(1,128)}', space=vmem, size = 0x12000, scoped, tag = 'internal scratch']
  %s0 = inlined_call_operand.hbm [shape: f32[16,32], index: 0, kind: input, shape index: {}]
  %s1 = inlined_call_operand.hbm [shape: f32[32,128], index: 1, kind: input, shape index: {}]
  %s2 = inlined_call_operand.vmem [shape: f32[1,128], index: 2, kind: input, shape index: {}]
  %s3 = inlined_call_operand.hbm [shape: f32[128,128], index: 3, kind: input, shape index: {}]
  %s4 = inlined_call_operand.vmem [shape: f32[1,128], index: 4, kind: input, shape index: {}]
  %s5 = inlined_call_operand.hbm [shape: f32[128,128], index: 5, kind: input, shape index: {}]
  %s6 = inlined_call_operand.vmem [shape: f32[1,128], index: 6, kind: input, shape index: {}]
  %s7 = inlined_call_operand.hbm [shape: f32[16,128], index: 7, kind: output, shape index: {}]
  %s8 = sld [smem:[#allocation0]]
  $region54: #{tpu_custom_call.1} parent=0
    _
  %s10 = ssub.s32 1, %s8
  %s11 = scalar_select 0, %s10, %s8
  $region1: #{tpu_custom_call.1} parent=0
    #allocation2 [shape = 'u8[8192]{0}', space=vmem, size = 0x2000, scoped, tag = 'input window, operand 0, single buffered']
    #allocation3 [shape = 's32[1]{0}', space=sflag, size = 0x4, scoped, tag = 'scoped memory for tpu_custom_call.1']
    #allocation4 [shape = 's32[1]{0}', space=sflag, size = 0x4, scoped, tag = 'scoped memory for tpu_custom_call.1']
    #allocation5 [shape = 'u8[16384]{0}', space=vmem, size = 0x4000, scoped, tag = 'input window, operand 1, single buffered']
    #allocation6 [shape = 's32[1]{0}', space=sflag, size = 0x4, scoped, tag = 'scoped memory for tpu_custom_call.1']
    #allocation7 [shape = 'u8[65536]{0}', space=vmem, size = 0x10000, scoped, tag = 'input window, operand 3, single buffered']
    #allocation8 [shape = 'u8[65536]{0}', space=vmem, size = 0x10000, scoped, tag = 'input window, operand 5, single buffered']
    #allocation9 [shape = 's32[1]{0}', space=sflag, size = 0x4, scoped, tag = 'scoped memory for tpu_custom_call.1']
    #allocation10 [shape = 'u8[8192]{0}', space=vmem, size = 0x2000, scoped, tag = 'output window, operand 0, single buffered']
    %12 = vsyncpa [#allocation3], 0
    %13 = vsyncpa [#allocation6], 0
    %14 = vsyncpa [#allocation9], 0
    %15 = vsyncpa [#allocation4], 0
    // Predicated region
    $region2: #{tpu_custom_call.1} parent=1 // pred_check
      _
    $region3: #{tpu_custom_call.1} parent=1 // pred_check_branch
      %17 = sbr.rel (0) target = $region5
    $region4: #{tpu_custom_call.1} parent=1 // pred_region
      %s19 = ssub.s32 256, 256
      %20 = vsyncadd [#allocation3], %s19
      %s21 = sshll.u32 [#allocation2], 4
      %s22 = int_to_ptr.vmem [resolvable:$true] %s21
      %27 = dma.hbm_to_vmem [thread:$0]  %s0, 256, %s22, [#allocation3], 128, 128, 8
    $region5: #{tpu_custom_call.1} parent=1 // pred_fallthru
      _
    // Predicated region
    $region6: #{tpu_custom_call.1} parent=1 // pred_check
      _
    $region7: #{tpu_custom_call.1} parent=1 // pred_check_branch
      %29 = sbr.rel (0) target = $region9
    $region8: #{tpu_custom_call.1} parent=1 // pred_region
      %s31 = ssub.s32 512, 512
      %32 = vsyncadd [#allocation6], %s31
      %s33 = sshll.u32 [#allocation5], 4
      %s34 = int_to_ptr.vmem [resolvable:$true] %s33
      %39 = dma.hbm_to_vmem [thread:$0]  %s1, 512, %s34, [#allocation6], 128, 128, 8
    $region9: #{tpu_custom_call.1} parent=1 // pred_fallthru
      _
    // Predicated region
    $region10: #{tpu_custom_call.1} parent=1 // pred_check
      _
    $region11: #{tpu_custom_call.1} parent=1 // pred_check_branch
      %41 = sbr.rel (0) target = $region13
    $region12: #{tpu_custom_call.1} parent=1 // pred_region
      _
    $region13: #{tpu_custom_call.1} parent=1 // pred_fallthru
      _
    // Predicated region
    $region14: #{tpu_custom_call.1} parent=1 // pred_check
      _
    $region15: #{tpu_custom_call.1} parent=1 // pred_check_branch
      %43 = sbr.rel (0) target = $region17
    $region16: #{tpu_custom_call.1} parent=1 // pred_region
      %s45 = ssub.s32 2048, 2048
      %46 = vsyncadd [#allocation6], %s45
      %s47 = sshll.u32 [#allocation7], 4
      %s48 = int_to_ptr.vmem [resolvable:$true] %s47
      %53 = dma.hbm_to_vmem [thread:$0]  %s3, 2048, %s48, [#allocation6], 128, 128, 8
    $region17: #{tpu_custom_call.1} parent=1 // pred_fallthru
      _
    // Predicated region
    $region18: #{tpu_custom_call.1} parent=1 // pred_check
      _
    $region19: #{tpu_custom_call.1} parent=1 // pred_check_branch
      %55 = sbr.rel (0) target = $region21
    $region20: #{tpu_custom_call.1} parent=1 // pred_region
      _
    $region21: #{tpu_custom_call.1} parent=1 // pred_fallthru
      _
    // Predicated region
    $region22: #{tpu_custom_call.1} parent=1 // pred_check
      _
    $region23: #{tpu_custom_call.1} parent=1 // pred_check_branch
      %57 = sbr.rel (0) target = $region25
    $region24: #{tpu_custom_call.1} parent=1 // pred_region
      %s59 = ssub.s32 2048, 2048
      %60 = vsyncadd [#allocation9], %s59
      %s61 = sshll.u32 [#allocation8], 4
      %s62 = int_to_ptr.vmem [resolvable:$true] %s61
      %67 = dma.hbm_to_vmem [thread:$0]  %s5, 2048, %s62, [#allocation9], 128, 128, 8
    $region25: #{tpu_custom_call.1} parent=1 // pred_fallthru
      _
    // Predicated region
    $region26: #{tpu_custom_call.1} parent=1 // pred_check
      _
    $region27: #{tpu_custom_call.1} parent=1 // pred_check_branch
      %69 = sbr.rel (0) target = $region29
    $region28: #{tpu_custom_call.1} parent=1 // pred_region
      _
    $region29: #{tpu_custom_call.1} parent=1 // pred_fallthru
      _
    // Predicated region
    $region30: #{tpu_custom_call.1} parent=1 // pred_check
      _
    $region31: #{tpu_custom_call.1} parent=1 // pred_check_branch
      %71 = sbr.rel (0) target = $region33
    $region32: #{tpu_custom_call.1} parent=1 // pred_region
      %72 = dma.done [#allocation3], 256
    $region33: #{tpu_custom_call.1} parent=1 // pred_fallthru
      _
    // Predicated region
    $region34: #{tpu_custom_call.1} parent=1 // pred_check
      _
    $region35: #{tpu_custom_call.1} parent=1 // pred_check_branch
      %74 = sbr.rel (0) target = $region37
    $region36: #{tpu_custom_call.1} parent=1 // pred_region
      %75 = dma.done [#allocation6], 512
    $region37: #{tpu_custom_call.1} parent=1 // pred_fallthru
      _
    // Predicated region
    $region38: #{tpu_custom_call.1} parent=1 // pred_check
      _
    $region39: #{tpu_custom_call.1} parent=1 // pred_check_branch
      %77 = sbr.rel (0) target = $region41
    $region40: #{tpu_custom_call.1} parent=1 // pred_region
      %78 = dma.done [#allocation6], 2048
    $region41: #{tpu_custom_call.1} parent=1 // pred_fallthru
      _
    // Predicated region
    $region42: #{tpu_custom_call.1} parent=1 // pred_check
      _
    $region43: #{tpu_custom_call.1} parent=1 // pred_check_branch
      %80 = sbr.rel (0) target = $region45
    $region44: #{tpu_custom_call.1} parent=1 // pred_region
      %81 = dma.done [#allocation9], 2048
    $region45: #{tpu_custom_call.1} parent=1 // pred_fallthru
      _
    %v82 = vld [vmem:[#allocation2] sm:$0xff]
    %v83 = vld [vmem:[#allocation2 + $0x8] sm:$0xff]
    %v84 = vld [vmem:[#allocation5] sm:$0xff]
    %v85 = vld [vmem:[#allocation5 + $0x8] sm:$0xff]
    %v86 = vld [vmem:[#allocation5 + $0x10] sm:$0xff]
    %v87 = vld [vmem:[#allocation5 + $0x18] sm:$0xff]
    %v88 = vld [vmem:[%s2] sm:$0x1]
    %v90 = vlaneseq
    %v91 = vshrl.u32 %v90, 7
    %v92 = vsub.s32 0, %v91
    %v93 = vrot.slane %v88, %v92
    %vm95 = vcmask 261120
    %v97 = vsel %vm95, %v82, 0
    %v100 = vsel %vm95, %v83, 0
    %102 = vmatprep.subr.mxu0 0.0
    %103 = vmatpush1.msra.mxu0 0.0
    %104 = vmatprep.subr.mxu0 0.0
    %105 = vmatpush1.msra.mxu0 0.0
    %106 = vmatprep.subr.mxu0 0.0
    %107 = vmatpush1.msra.mxu0 0.0
    %108 = vmatprep.subr.mxu0 0.0
    %109 = vmatpush1.msra.mxu0 0.0
    %110 = vmatprep.subr.mxu0 0.0
    %111 = vmatpush1.msra.mxu0 0.0
    %112 = vmatprep.subr.mxu0 0.0
    %113 = vmatpush1.msra.mxu0 0.0
    %114 = vmatprep.subr.mxu0 0.0
    %115 = vmatpush1.msra.mxu0 0.0
    %116 = vmatprep.subr.mxu0 0.0
    %117 = vmatpush1.msra.mxu0 0.0
    %118 = vmatprep.subr.mxu0 0.0
    %119 = vmatpush1.msra.mxu0 0.0
    %120 = vmatprep.subr.mxu0 0.0
    %121 = vmatpush1.msra.mxu0 0.0
    %122 = vmatprep.subr.mxu0 0.0
    %123 = vmatpush1.msra.mxu0 0.0
    %124 = vmatprep.subr.mxu0 0.0
    %125 = vmatpush1.msra.mxu0 0.0
    %126 = vmatprep.subr.mxu0 0.0
    %127 = vmatpush1.msra.mxu0 %v87
    %128 = vmatprep.subr.mxu0 0.0
    %129 = vmatpush1.msra.mxu0 %v86
    %130 = vmatprep.subr.mxu0 0.0
    %131 = vmatpush1.msra.mxu0 %v85
    %132 = vmatprep.subr.mxu0 0.0
    %133 = vmatpush1.msra.mxu0 %v84
    %134 = vmatprep.subr.mxu0 0.0
    %135 = vmatpush2.msra.mxu0 0.0
    %136 = vmatprep.subr.mxu0 0.0
    %137 = vmatpush2.msra.mxu0 0.0
    %138 = vmatprep.subr.mxu0 0.0
    %139 = vmatpush2.msra.mxu0 0.0
    %140 = vmatprep.subr.mxu0 0.0
    %141 = vmatpush2.msra.mxu0 0.0
    %142 = vmatprep.subr.mxu0 0.0
    %143 = vmatpush2.msra.mxu0 0.0
    %144 = vmatprep.subr.mxu0 0.0
    %145 = vmatpush2.msra.mxu0 0.0
    %146 = vmatprep.subr.mxu0 0.0
    %147 = vmatpush2.msra.mxu0 0.0
    %148 = vmatprep.subr.mxu0 0.0
    %149 = vmatpush2.msra.mxu0 0.0
    %150 = vmatprep.subr.mxu0 0.0
    %151 = vmatpush2.msra.mxu0 0.0
    %152 = vmatprep.subr.mxu0 0.0
    %153 = vmatpush2.msra.mxu0 0.0
    %154 = vmatprep.subr.mxu0 0.0
    %155 = vmatpush2.msra.mxu0 0.0
    %156 = vmatprep.subr.mxu0 0.0
    %157 = vmatpush2.msra.mxu0 0.0
    %158 = vmatprep.subr.mxu0 0.0
    %159 = vmatpush2.msra.mxu0 0.0
    %160 = vmatprep.subr.mxu0 0.0
    %161 = vmatpush2.msra.mxu0 0.0
    %162 = vmatprep.subr.mxu0 0.0
    %163 = vmatpush2.msra.mxu0 0.0
    %164 = vmatprep.subr.mxu0 0.0
    %165 = vmatpush2.msra.mxu0 0.0
    %166 = vmatprep.mubr.f32.mxu0 0.0
    %167 = vmatmul.mubr.f32.gmra.mxu0 %v97
    %v168 = vpop.f32.mrf.mxu0
    %v169 = vadd.f32 %v93, %v168
    %v170 = vpop.f32.mrf.mxu0
    %171 = vmatprep.mubr.f32.mxu0 0.0
    %172 = vmatmul.mubr.f32.gmra.mxu0 %v100
    %v173 = vpop.f32.mrf.mxu0
    %v174 = vadd.f32 %v93, %v173
    %v175 = vpop.f32.mrf.mxu0
    %176 = vdwg.mxu0
    %v177 = vmax.f32 %v169, 0.0
    %v178 = vmax.f32 %v174, 0.0
    %v179 = vld [vmem:[#allocation7] sm:$0xff]
    %v180 = vld [vmem:[#allocation7 + $0x8] sm:$0xff]
    %v181 = vld [vmem:[#allocation7 + $0x10] sm:$0xff]
    %v182 = vld [vmem:[#allocation7 + $0x18] sm:$0xff]
    %v183 = vld [vmem:[#allocation7 + $0x20] sm:$0xff]
    %v184 = vld [vmem:[#allocation7 + $0x28] sm:$0xff]
    %v185 = vld [vmem:[#allocation7 + $0x30] sm:$0xff]
    %v186 = vld [vmem:[#allocation7 + $0x38] sm:$0xff]
    %v187 = vld [vmem:[#allocation7 + $0x40] sm:$0xff]
    %v188 = vld [vmem:[#allocation7 + $0x48] sm:$0xff]
    %v189 = vld [vmem:[#allocation7 + $0x50] sm:$0xff]
    %v190 = vld [vmem:[#allocation7 + $0x58] sm:$0xff]
    %v191 = vld [vmem:[#allocation7 + $0x60] sm:$0xff]
    %v192 = vld [vmem:[#allocation7 + $0x68] sm:$0xff]
    %v193 = vld [vmem:[#allocation7 + $0x70] sm:$0xff]
    %v194 = vld [vmem:[#allocation7 + $0x78] sm:$0xff]
    %v195 = vld [vmem:[%s4] sm:$0x1]
    %v197 = vlaneseq
    %v198 = vshrl.u32 %v197, 7
    %v199 = vsub.s32 0, %v198
    %v200 = vrot.slane %v195, %v199
    %202 = vmatprep.subr.mxu0 0.0
    %203 = vmatpush1.msra.mxu0 %v194
    %204 = vmatprep.subr.mxu0 0.0
    %205 = vmatpush1.msra.mxu0 %v193
    %206 = vmatprep.subr.mxu0 0.0
    %207 = vmatpush1.msra.mxu0 %v192
    %208 = vmatprep.subr.mxu0 0.0
    %209 = vmatpush1.msra.mxu0 %v191
    %210 = vmatprep.subr.mxu0 0.0
    %211 = vmatpush1.msra.mxu0 %v190
    %212 = vmatprep.subr.mxu0 0.0
    %213 = vmatpush1.msra.mxu0 %v189
    %214 = vmatprep.subr.mxu0 0.0
    %215 = vmatpush1.msra.mxu0 %v188
    %216 = vmatprep.subr.mxu0 0.0
    %217 = vmatpush1.msra.mxu0 %v187
    %218 = vmatprep.subr.mxu0 0.0
    %219 = vmatpush1.msra.mxu0 %v186
    %220 = vmatprep.subr.mxu0 0.0
    %221 = vmatpush1.msra.mxu0 %v185
    %222 = vmatprep.subr.mxu0 0.0
    %223 = vmatpush1.msra.mxu0 %v184
    %224 = vmatprep.subr.mxu0 0.0
    %225 = vmatpush1.msra.mxu0 %v183
    %226 = vmatprep.subr.mxu0 0.0
    %227 = vmatpush1.msra.mxu0 %v182
    %228 = vmatprep.subr.mxu0 0.0
    %229 = vmatpush1.msra.mxu0 %v181
    %230 = vmatprep.subr.mxu0 0.0
    %231 = vmatpush1.msra.mxu0 %v180
    %232 = vmatprep.subr.mxu0 0.0
    %233 = vmatpush1.msra.mxu0 %v179
    %234 = vmatprep.subr.mxu0 0.0
    %235 = vmatpush2.msra.mxu0 0.0
    %236 = vmatprep.subr.mxu0 0.0
    %237 = vmatpush2.msra.mxu0 0.0
    %238 = vmatprep.subr.mxu0 0.0
    %239 = vmatpush2.msra.mxu0 0.0
    %240 = vmatprep.subr.mxu0 0.0
    %241 = vmatpush2.msra.mxu0 0.0
    %242 = vmatprep.subr.mxu0 0.0
    %243 = vmatpush2.msra.mxu0 0.0
    %244 = vmatprep.subr.mxu0 0.0
    %245 = vmatpush2.msra.mxu0 0.0
    %246 = vmatprep.subr.mxu0 0.0
    %247 = vmatpush2.msra.mxu0 0.0
    %248 = vmatprep.subr.mxu0 0.0
    %249 = vmatpush2.msra.mxu0 0.0
    %250 = vmatprep.subr.mxu0 0.0
    %251 = vmatpush2.msra.mxu0 0.0
    %252 = vmatprep.subr.mxu0 0.0
    %253 = vmatpush2.msra.mxu0 0.0
    %254 = vmatprep.subr.mxu0 0.0
    %255 = vmatpush2.msra.mxu0 0.0
    %256 = vmatprep.subr.mxu0 0.0
    %257 = vmatpush2.msra.mxu0 0.0
    %258 = vmatprep.subr.mxu0 0.0
    %259 = vmatpush2.msra.mxu0 0.0
    %260 = vmatprep.subr.mxu0 0.0
    %261 = vmatpush2.msra.mxu0 0.0
    %262 = vmatprep.subr.mxu0 0.0
    %263 = vmatpush2.msra.mxu0 0.0
    %264 = vmatprep.subr.mxu0 0.0
    %265 = vmatpush2.msra.mxu0 0.0
    %266 = vmatprep.mubr.f32.mxu0 0.0
    %267 = vmatmul.mubr.f32.gmra.mxu0 %v177
    %v268 = vpop.f32.mrf.mxu0
    %v269 = vadd.f32 %v200, %v268
    %v270 = vpop.f32.mrf.mxu0
    %271 = vmatprep.mubr.f32.mxu0 0.0
    %272 = vmatmul.mubr.f32.gmra.mxu0 %v178
    %v273 = vpop.f32.mrf.mxu0
    %v274 = vadd.f32 %v200, %v273
    %v275 = vpop.f32.mrf.mxu0
    %276 = vdwg.mxu0
    %v277 = vmax.f32 %v269, 0.0
    %v278 = vmax.f32 %v274, 0.0
    %v279 = vld [vmem:[#allocation8] sm:$0xff]
    %v280 = vld [vmem:[#allocation8 + $0x8] sm:$0xff]
    %v281 = vld [vmem:[#allocation8 + $0x10] sm:$0xff]
    %v282 = vld [vmem:[#allocation8 + $0x18] sm:$0xff]
    %v283 = vld [vmem:[#allocation8 + $0x20] sm:$0xff]
    %v284 = vld [vmem:[#allocation8 + $0x28] sm:$0xff]
    %v285 = vld [vmem:[#allocation8 + $0x30] sm:$0xff]
    %v286 = vld [vmem:[#allocation8 + $0x38] sm:$0xff]
    %v287 = vld [vmem:[#allocation8 + $0x40] sm:$0xff]
    %v288 = vld [vmem:[#allocation8 + $0x48] sm:$0xff]
    %v289 = vld [vmem:[#allocation8 + $0x50] sm:$0xff]
    %v290 = vld [vmem:[#allocation8 + $0x58] sm:$0xff]
    %v291 = vld [vmem:[#allocation8 + $0x60] sm:$0xff]
    %v292 = vld [vmem:[#allocation8 + $0x68] sm:$0xff]
    %v293 = vld [vmem:[#allocation8 + $0x70] sm:$0xff]
    %v294 = vld [vmem:[#allocation8 + $0x78] sm:$0xff]
    %v295 = vld [vmem:[%s6] sm:$0x1]
    %v297 = vlaneseq
    %v298 = vshrl.u32 %v297, 7
    %v299 = vsub.s32 0, %v298
    %v300 = vrot.slane %v295, %v299
    %302 = vmatprep.subr.mxu0 0.0
    %303 = vmatpush1.msra.mxu0 %v294
    %304 = vmatprep.subr.mxu0 0.0
    %305 = vmatpush1.msra.mxu0 %v293
    %306 = vmatprep.subr.mxu0 0.0
    %307 = vmatpush1.msra.mxu0 %v292
    %308 = vmatprep.subr.mxu0 0.0
    %309 = vmatpush1.msra.mxu0 %v291
    %310 = vmatprep.subr.mxu0 0.0
    %311 = vmatpush1.msra.mxu0 %v290
    %312 = vmatprep.subr.mxu0 0.0
    %313 = vmatpush1.msra.mxu0 %v289
    %314 = vmatprep.subr.mxu0 0.0
    %315 = vmatpush1.msra.mxu0 %v288
    %316 = vmatprep.subr.mxu0 0.0
    %317 = vmatpush1.msra.mxu0 %v287
    %318 = vmatprep.subr.mxu0 0.0
    %319 = vmatpush1.msra.mxu0 %v286
    %320 = vmatprep.subr.mxu0 0.0
    %321 = vmatpush1.msra.mxu0 %v285
    %322 = vmatprep.subr.mxu0 0.0
    %323 = vmatpush1.msra.mxu0 %v284
    %324 = vmatprep.subr.mxu0 0.0
    %325 = vmatpush1.msra.mxu0 %v283
    %326 = vmatprep.subr.mxu0 0.0
    %327 = vmatpush1.msra.mxu0 %v282
    %328 = vmatprep.subr.mxu0 0.0
    %329 = vmatpush1.msra.mxu0 %v281
    %330 = vmatprep.subr.mxu0 0.0
    %331 = vmatpush1.msra.mxu0 %v280
    %332 = vmatprep.subr.mxu0 0.0
    %333 = vmatpush1.msra.mxu0 %v279
    %334 = vmatprep.subr.mxu0 0.0
    %335 = vmatpush2.msra.mxu0 0.0
    %336 = vmatprep.subr.mxu0 0.0
    %337 = vmatpush2.msra.mxu0 0.0
    %338 = vmatprep.subr.mxu0 0.0
    %339 = vmatpush2.msra.mxu0 0.0
    %340 = vmatprep.subr.mxu0 0.0
    %341 = vmatpush2.msra.mxu0 0.0
    %342 = vmatprep.subr.mxu0 0.0
    %343 = vmatpush2.msra.mxu0 0.0
    %344 = vmatprep.subr.mxu0 0.0
    %345 = vmatpush2.msra.mxu0 0.0
    %346 = vmatprep.subr.mxu0 0.0
    %347 = vmatpush2.msra.mxu0 0.0
    %348 = vmatprep.subr.mxu0 0.0
    %349 = vmatpush2.msra.mxu0 0.0
    %350 = vmatprep.subr.mxu0 0.0
    %351 = vmatpush2.msra.mxu0 0.0
    %352 = vmatprep.subr.mxu0 0.0
    %353 = vmatpush2.msra.mxu0 0.0
    %354 = vmatprep.subr.mxu0 0.0
    %355 = vmatpush2.msra.mxu0 0.0
    %356 = vmatprep.subr.mxu0 0.0
    %357 = vmatpush2.msra.mxu0 0.0
    %358 = vmatprep.subr.mxu0 0.0
    %359 = vmatpush2.msra.mxu0 0.0
    %360 = vmatprep.subr.mxu0 0.0
    %361 = vmatpush2.msra.mxu0 0.0
    %362 = vmatprep.subr.mxu0 0.0
    %363 = vmatpush2.msra.mxu0 0.0
    %364 = vmatprep.subr.mxu0 0.0
    %365 = vmatpush2.msra.mxu0 0.0
    %366 = vmatprep.mubr.f32.mxu0 0.0
    %367 = vmatmul.mubr.f32.gmra.mxu0 %v277
    %v368 = vpop.f32.mrf.mxu0
    %v369 = vadd.f32 %v300, %v368
    %v370 = vpop.f32.mrf.mxu0
    %371 = vmatprep.mubr.f32.mxu0 0.0
    %372 = vmatmul.mubr.f32.gmra.mxu0 %v278
    %v373 = vpop.f32.mrf.mxu0
    %v374 = vadd.f32 %v300, %v373
    %v375 = vpop.f32.mrf.mxu0
    %376 = vdwg.mxu0
    %377 = vmax.xlane.f32.xlu0 %v369
    %v378 = vpop.xlane.xlu0 %377
    %379 = vmax.xlane.f32.xlu0 %v374
    %v380 = vpop.xlane.xlu0 %379
    %v381 = vsub.f32 %v369, %v378
    %v382 = vsub.f32 %v374, %v380
    %v383 = vmul.f32 %v381, 1.442695
    %v384 = vpow.pop %v383
    %v385 = vmul.f32 %v382, 1.442695
    %v386 = vpow.pop %v385
    %387 = vadd.xlane.f32.xlu0 %v384
    %v388 = vpop.xlane.xlu0 %387
    %389 = vadd.xlane.f32.xlu0 %v386
    %v390 = vpop.xlane.xlu0 %389
    %v391 = vrcp.pop %v388
    %v392 = vrcp.pop %v390
    %v393 = vmul.f32 %v384, %v391
    %v394 = vmul.f32 %v386, %v392
    %395 = vst [vmem:[#allocation10] sm:$0xff] %v393
    %396 = vst [vmem:[#allocation10 + $0x8] sm:$0xff] %v394
    // Predicated region
    $region46: #{tpu_custom_call.1} parent=1 // pred_check
      _
    $region47: #{tpu_custom_call.1} parent=1 // pred_check_branch
      %398 = sbr.rel (0) target = $region49
    $region48: #{tpu_custom_call.1} parent=1 // pred_region
      %s400 = ssub.s32 256, 256
      %401 = vsyncadd [#allocation4], %s400
      %s402 = sshll.u32 [#allocation10], 4
      %s403 = int_to_ptr.vmem [resolvable:$true] %s402
      %408 = dma.vmem_to_hbm [thread:$0]  %s403, 256, %s7, [#allocation4], 128, 128, 8
    $region49: #{tpu_custom_call.1} parent=1 // pred_fallthru
      _
    // Predicated region
    $region50: #{tpu_custom_call.1} parent=1 // pred_check
      _
    $region51: #{tpu_custom_call.1} parent=1 // pred_check_branch
      %410 = sbr.rel (0) target = $region53
    $region52: #{tpu_custom_call.1} parent=1 // pred_region
      %411 = dma.done [#allocation4], 256
    $region53: #{tpu_custom_call.1} parent=1 // pred_fallthru
      _
    %412 = vsyncpa [#allocation3], 1
    %413 = vsyncpa [#allocation6], 1
    %414 = vsyncpa [#allocation9], 1
    %415 = vsyncpa [#allocation4], 1

</llo_original>
